<compile_context>
chip_gen: v5e
topology: v5e:2x2
jax: 0.10.0
libtpu: 0.0.40
codegen_flags: <defaults>
</compile_context>

<pallas_src>
import functools

import jax
import jax.numpy as jnp
from jax.experimental import pallas as pl
from jax.experimental.pallas import tpu as pltpu

_EPS = 1e-5


# ----------------------------- kernels -------------------------------------


def _film_nchw_kernel(x_ref, gb_ref, o_ref, *, C, bf16_affine):
    # x_ref:  (TB, C, TP)  NCHW-native block: channels on sublanes, H*W on lanes
    # gb_ref: (TB, 2C, 1)  per-batch [gamma ; beta] in f32
    # o_ref:  (TB, C, TP)
    x = x_ref[...].astype(jnp.float32)
    inv_c = 1.0 / C
    # One pass over x: mean and E[x^2] together, stats in f32.  The reduction
    # runs over channels (sublanes), so padded lanes / padded batch rows of a
    # partial block stay in their own lanes/rows and are masked on store.
    mean = jnp.sum(x, axis=1, keepdims=True) * inv_c           # (TB, 1, TP)
    mean_sq = jnp.sum(x * x, axis=1, keepdims=True) * inv_c    # (TB, 1, TP)
    var = jnp.maximum(mean_sq - mean * mean, 0.0)              # clamp: no NaN via cancellation
    xn = (x - mean) * jax.lax.rsqrt(var + _EPS)                # LayerNorm over C
    gb = gb_ref[...]
    gamma = gb[:, :C, :]                                       # (TB, C, 1) -> lane broadcast
    beta = gb[:, C:, :]
    if bf16_affine:
        # v6e/v7x: packed-bf16 VALU; output is bf16 anyway.
        out = (xn.astype(jnp.bfloat16) * gamma.astype(jnp.bfloat16)
               + beta.astype(jnp.bfloat16))
    else:
        out = xn * gamma + beta
    o_ref[...] = out.astype(o_ref.dtype)


def _film_2d_kernel(x_ref, gb_ref, o_ref, *, C):
    # x_ref: (TB, C)  -- LayerNorm over the feature (lane) axis.
    # gb_ref:(TB, 2C) -- [gamma ; beta]
    x = x_ref[...].astype(jnp.float32)
    inv_c = 1.0 / C
    mean = jnp.sum(x, axis=-1, keepdims=True) * inv_c
    mean_sq = jnp.sum(x * x, axis=-1, keepdims=True) * inv_c
    var = jnp.maximum(mean_sq - mean * mean, 0.0)
    xn = (x - mean) * jax.lax.rsqrt(var + _EPS)
    gb = gb_ref[...].astype(jnp.float32)
    o_ref[...] = (xn * gb[:, :C] + gb[:, C:]).astype(o_ref.dtype)


# --------------------------- sizing helpers ---------------------------------


def _scoped_vmem_limit():
    """Per-generation scoped-VMEM target, leaving headroom under physical VMEM."""
    cap = None
    try:
        cap = getattr(pltpu.get_tpu_info(), "vmem_capacity_bytes", None)
    except Exception:
        cap = None
    if cap is None:
        cap = 64 * 1024 * 1024                 # conservative: assume v7x-sized VMEM
    if cap >= 100 * 1024 * 1024:               # v5e / v6e (128 MiB physical)
        return 64 * 1024 * 1024
    return 40 * 1024 * 1024                    # v7x (64 MiB physical)


def _use_bf16_affine(dtype):
    if jnp.dtype(dtype) != jnp.dtype(jnp.bfloat16):
        return False
    try:
        kind = jax.devices()[0].device_kind.lower()
    except Exception:
        return False
    return "v5" not in kind                    # v5e has no bf16 VALU


def _choose_tiles_4d(B, C, P, itemsize, limit_bytes):
    """(TB, TP) block sizes for the (B, C, P) view.

    Per-step working set accounted as:
      2x double-buffered input blocks + 2x output blocks (input dtype)
      + ~4 block-sized f32 temporaries (x, x*x, xn, affine result).
    """
    per_elem = 4 * itemsize + 4 * 4
    max_elems = max(C * 128, limit_bytes // per_elem)
    # Lane tile: largest multiple of 128 -- no divisibility requirement, the
    # last partial tile is handled by cdiv + masked stores.
    tp = max(128, ((max_elems // max(1, C)) // 128) * 128)
    if tp >= P:
        tp = P
    # Batch tile: fill the remaining budget to amortize per-step overhead.
    tb = max(1, min(B, max_elems // max(1, C * tp)))
    # Keep >= 2 parallel grid steps when possible (v7x has 2 TCs per chip).
    if pl.cdiv(B, tb) * pl.cdiv(P, tp) < 2:
        if B >= 2:
            tb = pl.cdiv(B, 2)
        elif P > 128:
            tp = max(128, pl.cdiv(pl.cdiv(P, 2), 128) * 128)
    return tb, tp


def _choose_tile_2d(B, C, itemsize, limit_bytes):
    # x/out double-buffered + ~3 f32 temp rows + double-buffered (2C) gb rows.
    per_row = C * (4 * itemsize + 12) + 4 * C * 4
    max_rows = max(8, limit_bytes // max(1, per_row))
    if B <= max_rows:
        return B                               # full-extent block: always legal
    return max(8, (max_rows // 8) * 8)         # sublane-aligned tile, cdiv handles remainder


# ------------------------------ forward -------------------------------------


def film_forward(x, cond, weight, bias):
    """FILM forward.

    x:      (B, C, H, W) NCHW  -- or (B, C) for the 2D branch
    cond:   (B, cond_dim)
    weight: (2C, cond_dim)   (PyTorch nn.Linear layout)
    bias:   (2C,)
    """
    # Conditioning Linear hoisted to XLA: a tiny (B,D)@(D,2C) matmul would only
    # waste MXU / VMEM inside the memory-bound kernel.
    gb = (cond @ weight.T + bias).astype(jnp.float32)      # (B, 2C) = [gamma | beta]
    C = weight.shape[0] // 2
    limit = _scoped_vmem_limit()

    if x.ndim > 2:
        assert x.ndim == 4, "FILM 4D branch expects NCHW input"
        B, Cx, H, W = x.shape
        P = H * W
        x_flat = x.reshape(B, Cx, P)                        # free view, no copy
        TB, TP = _choose_tiles_4d(B, Cx, P, x.dtype.itemsize, limit)
        # TODO(synk): for very small C (<8 f32 / <16 bf16) on v7x the padded
        # sublanes can make the VPU/store slot the binder; that case may be
        # better left to XLA fusion.
        kernel = functools.partial(
            _film_nchw_kernel, C=Cx, bf16_affine=_use_bf16_affine(x.dtype))
        out = pl.pallas_call(
            kernel,
            out_shape=jax.ShapeDtypeStruct((B, Cx, P), x.dtype),
            grid_spec=pltpu.PrefetchScalarGridSpec(
                num_scalar_prefetch=0,
                grid=(pl.cdiv(B, TB), pl.cdiv(P, TP)),
                in_specs=[
                    pl.BlockSpec((TB, Cx, TP), lambda b, p: (b, 0, p)),
                    pl.BlockSpec((TB, 2 * Cx, 1), lambda b, p: (b, 0, 0)),
                ],
                out_specs=pl.BlockSpec((TB, Cx, TP), lambda b, p: (b, 0, p)),
            ),
            compiler_params=pltpu.CompilerParams(
                dimension_semantics=("parallel", "parallel"),
                vmem_limit_bytes=limit,
            ),
        )(x_flat, gb.reshape(B, 2 * C, 1))
        return out.reshape(B, Cx, H, W)
    else:
        B, Cx = x.shape
        TB = _choose_tile_2d(B, Cx, x.dtype.itemsize, limit)
        kernel = functools.partial(_film_2d_kernel, C=Cx)
        return pl.pallas_call(
            kernel,
            out_shape=jax.ShapeDtypeStruct((B, Cx), x.dtype),
            grid_spec=pltpu.PrefetchScalarGridSpec(
                num_scalar_prefetch=0,
                grid=(pl.cdiv(B, TB),),
                in_specs=[
                    pl.BlockSpec((TB, Cx), lambda b: (b, 0)),
                    pl.BlockSpec((TB, 2 * Cx), lambda b: (b, 0)),
                ],
                out_specs=pl.BlockSpec((TB, Cx), lambda b: (b, 0)),
            ),
            compiler_params=pltpu.CompilerParams(
                dimension_semantics=("parallel",),
                vmem_limit_bytes=limit,
            ),
        )(x, gb)


# ------------------------------ reference -----------------------------------


def _film_ref(x, cond, weight, bias):
    """Pure-JAX reference mirroring the PyTorch forward (f32)."""
    gb = cond @ weight.T + bias
    C = x.shape[1]
    gamma, beta = gb[..., :C], gb[..., C:]
    if x.ndim > 2:
        xt = jnp.transpose(x, (0, 2, 3, 1))          # NHWC
        mean = jnp.mean(xt, axis=-1, keepdims=True)
        var = jnp.mean((xt - mean) ** 2, axis=-1, keepdims=True)
        ln = (xt - mean) / jnp.sqrt(var + _EPS)
        ln = jnp.transpose(ln, (0, 3, 1, 2))         # NCHW
        return ln * gamma[:, :, None, None] + beta[:, :, None, None]
    else:
        mean = jnp.mean(x, axis=-1, keepdims=True)
        var = jnp.mean((x - mean) ** 2, axis=-1, keepdims=True)
        ln = (x - mean) / jnp.sqrt(var + _EPS)
        return ln * gamma + beta


if __name__ == "__main__":
    B, C, H, W = 2, 4, 16, 16        # input_dim = C
    cond_dim = 8

    key = jax.random.PRNGKey(0)
    kx, kc, kw, kb = jax.random.split(key, 4)

    x = jax.random.normal(kx, (B, C, H, W), dtype=jnp.float32)
    cond = jax.random.normal(kc, (B, cond_dim), dtype=jnp.float32)
    # Deterministic "Linear(cond_dim, 2*C)" parameters (synthetic init).
    weight = jax.random.normal(kw, (2 * C, cond_dim), dtype=jnp.float32) * 0.1
    bias = jax.random.normal(kb, (2 * C,), dtype=jnp.float32) * 0.1

    # 4D f32 path.
    out = jax.block_until_ready(film_forward(x, cond, weight, bias))
    ref = _film_ref(x, cond, weight, bias)
    assert out.shape == (B, C, H, W)
    assert jnp.max(jnp.abs(out - ref)) < 1e-4

    # 2D path.
    x2 = jax.random.normal(kx, (B, C), dtype=jnp.float32)
    out2 = jax.block_until_ready(film_forward(x2, cond, weight, bias))
    ref2 = _film_ref(x2, cond, weight, bias)
    assert jnp.max(jnp.abs(out2 - ref2)) < 1e-4

    # 4D bf16 path (exercises the bf16 affine epilogue on v6e/v7x, f32 on v5e).
    xb = x.astype(jnp.bfloat16)
    outb = jax.block_until_ready(film_forward(xb, cond, weight, bias))
    assert outb.dtype == jnp.bfloat16
    outb_f32 = outb.astype(jnp.float32)
    assert bool(jnp.all(jnp.isfinite(outb_f32)))
    assert jnp.max(jnp.abs(outb_f32 - ref)) < 0.15

    print("KERNEL_OK")
</pallas_src>

<mosaic_0001>
module attributes {stable_mosaic.version = 11 : i64} {
  func.func @_film_nchw_kernel(%arg0: i32, %arg1: i32, %arg2: memref<1x4x256xf32, #tpu.memory_space<vmem>>, %arg3: memref<1x8x1xf32, #tpu.memory_space<vmem>>, %arg4: memref<1x4x256xf32, #tpu.memory_space<vmem>>) attributes {dimension_semantics = [#tpu.dimension_semantics<parallel>, #tpu.dimension_semantics<parallel>], iteration_bounds = array<i64: 2, 1>, scalar_prefetch = 0 : i64, scratch_operands = 0 : i64, tpu.core_type = #tpu.core_type<tc>, window_params = [{transform_indices = @transform_0, window_bounds = array<i64: 1, 4, 256>}, {transform_indices = @transform_1, window_bounds = array<i64: 1, 8, 1>}, {transform_indices = @transform_2, window_bounds = array<i64: 1, 4, 256>}]} {
    %c0 = arith.constant 0 : index
    %c0_0 = arith.constant 0 : index
    %c0_1 = arith.constant 0 : index
    %0 = vector.load %arg2[%c0, %c0_0, %c0_1] : memref<1x4x256xf32, #tpu.memory_space<vmem>>, vector<1x4x256xf32>
    %cst = arith.constant dense<0.000000e+00> : vector<1x256xf32>
    %1 = vector.multi_reduction <add>, %0, %cst [1] : vector<1x4x256xf32> to vector<1x256xf32>
    %2 = vector.shape_cast %1 : vector<1x256xf32> to vector<1x1x256xf32>
    %cst_2 = arith.constant 2.500000e-01 : f32
    %3 = vector.broadcast %cst_2 : f32 to vector<1x1x256xf32>
    %4 = arith.mulf %2, %3 : vector<1x1x256xf32>
    %5 = arith.mulf %0, %0 : vector<1x4x256xf32>
    %cst_3 = arith.constant dense<0.000000e+00> : vector<1x256xf32>
    %6 = vector.multi_reduction <add>, %5, %cst_3 [1] : vector<1x4x256xf32> to vector<1x256xf32>
    %7 = vector.shape_cast %6 : vector<1x256xf32> to vector<1x1x256xf32>
    %cst_4 = arith.constant 2.500000e-01 : f32
    %8 = vector.broadcast %cst_4 : f32 to vector<1x1x256xf32>
    %9 = arith.mulf %7, %8 : vector<1x1x256xf32>
    %10 = arith.mulf %4, %4 : vector<1x1x256xf32>
    %11 = arith.subf %9, %10 : vector<1x1x256xf32>
    %cst_5 = arith.constant 0.000000e+00 : f32
    %12 = vector.broadcast %cst_5 : f32 to vector<1x1x256xf32>
    %13 = arith.maximumf %11, %12 : vector<1x1x256xf32>
    %14 = vector.broadcast %4 : vector<1x1x256xf32> to vector<1x4x256xf32>
    %15 = arith.subf %0, %14 : vector<1x4x256xf32>
    %cst_6 = arith.constant 9.99999974E-6 : f32
    %16 = vector.broadcast %cst_6 : f32 to vector<1x1x256xf32>
    %17 = arith.addf %13, %16 : vector<1x1x256xf32>
    %18 = math.rsqrt %17 : vector<1x1x256xf32>
    %19 = vector.broadcast %18 : vector<1x1x256xf32> to vector<1x4x256xf32>
    %20 = arith.mulf %15, %19 : vector<1x4x256xf32>
    %c0_7 = arith.constant 0 : index
    %c0_8 = arith.constant 0 : index
    %c0_9 = arith.constant 0 : index
    %21 = vector.load %arg3[%c0_7, %c0_8, %c0_9] : memref<1x8x1xf32, #tpu.memory_space<vmem>>, vector<1x8x1xf32>
    %22 = vector.extract_strided_slice %21 {offsets = [0, 0, 0], sizes = [1, 4, 1], strides = [1, 1, 1]} : vector<1x8x1xf32> to vector<1x4x1xf32>
    %23 = vector.extract_strided_slice %21 {offsets = [0, 4, 0], sizes = [1, 4, 1], strides = [1, 1, 1]} : vector<1x8x1xf32> to vector<1x4x1xf32>
    %24 = vector.broadcast %22 : vector<1x4x1xf32> to vector<1x4x256xf32>
    %25 = arith.mulf %20, %24 : vector<1x4x256xf32>
    %26 = vector.broadcast %23 : vector<1x4x1xf32> to vector<1x4x256xf32>
    %27 = arith.addf %25, %26 : vector<1x4x256xf32>
    %c0_10 = arith.constant 0 : index
    %c0_11 = arith.constant 0 : index
    %c0_12 = arith.constant 0 : index
    %28 = vector.load %arg4[%c0_10, %c0_11, %c0_12] : memref<1x4x256xf32, #tpu.memory_space<vmem>>, vector<1x4x256xf32>
    tpu.vector_store %arg4[%c0_10, %c0_11, %c0_12], %27 {strides = array<i32>} : memref<1x4x256xf32, #tpu.memory_space<vmem>>, vector<1x4x256xf32>,
    return
  }
  func.func @transform_0(%arg0: i32, %arg1: i32) -> (i32, i32, i32) {
    %c0_i32 = arith.constant 0 : i32
    %c0_i32_0 = arith.constant 0 : i32
    return %arg0, %c0_i32, %arg1 : i32, i32, i32
  }
  func.func @transform_1(%arg0: i32, %arg1: i32) -> (i32, i32, i32) {
    %c0_i32 = arith.constant 0 : i32
    %c0_i32_0 = arith.constant 0 : i32
    %c0_i32_1 = arith.constant 0 : i32
    return %arg0, %c0_i32, %c0_i32_0 : i32, i32, i32
  }
  func.func @transform_2(%arg0: i32, %arg1: i32) -> (i32, i32, i32) {
    %c0_i32 = arith.constant 0 : i32
    %c0_i32_0 = arith.constant 0 : i32
    return %arg0, %c0_i32, %arg1 : i32, i32, i32
  }
}

</mosaic_0001>

<llo_original>
// kernel: tpu_custom_call.1
$region0: #{tpu_custom_call.1}
  #allocation0 [shape = 'u32[]', space=smem, size = 0x4, offset = 0x4, fixed_abs, tag = 'smem constant byte address 0x4 - core index']
  #allocation1 [shape = 'u32[72,128]{1,0:T(1,128)}', space=vmem, size = 0x9000, scoped, tag = 'internal scratch']
  %s0 = inlined_call_operand.vmem [shape: f32[2,4,256], index: 0, kind: input, shape index: {}]
  %s1 = inlined_call_operand.vmem [shape: f32[2,8,1], index: 1, kind: input, shape index: {}]
  %s2 = inlined_call_operand.hbm [shape: f32[2,4,256], index: 2, kind: output, shape index: {}]
  %s3 = sld [smem:[#allocation0]]
  $region41: #{tpu_custom_call.1} parent=0
    _
  %s5 = ssub.s32 1, %s3
  %s6 = scalar_select 0, %s5, %s3
  $region1: #{tpu_custom_call.1} parent=0
    #allocation2 [shape = 'u8[8192]{0}', space=vmem, size = 0x2000, scoped, tag = 'output window, operand 0']
    #allocation3 [shape = 's32[2]{0}', space=sflag, size = 0x8, scoped, tag = 'scoped memory for tpu_custom_call.1']
    %7 = vsyncpa [#allocation3], 0
    %s8 = scalar_lea.sflag [#allocation3], 1
    %9 = vsyncpa %s8, 0
    loop: start=0, step=1, limit=4
    $region2: #{tpu_custom_call.1} parent=1 // loop_pre_header
      _
    $region3: #{tpu_custom_call.1} parent=1 // loop_header
      %s11 = sphi 0, %s15
      %p12 = scmp.ge.s32.totalorder %s11, 4
      %s18 = sphi 0, %s30
      %s19 = sphi 0, %s26
      %s20 = sphi 0, %s18
      %s21 = sphi 0, %s19
      %s22 = sphi 0, %s20
      %s23 = sphi 0, %s21
      %s35 = sphi 0, %s37
      %s38 = sphi 0, %s35
      %s39 = sphi 0, %s38
      %s55 = sphi 0, %s39
      %s61 = sphi 0, %s63
      %s64 = sphi 0, %s61
      %s65 = sphi 0, %s64
      %s81 = sphi 0, %s65
      %s89 = sphi 0, %s91
      %s92 = sphi 0, %s89
      %s93 = sphi 0, %s92
      %s109 = sphi 0, %s93
    $region4: #{tpu_custom_call.1} parent=1 // loop_header_branch
      %14 = sbr.rel (%p12) target = $region8
    $region5: #{tpu_custom_call.1} parent=1 // loop_body
      %s16 = ssub.s32 %s11, 1
      %s17 = ssub.s32 %s11, 2
      %s24 = sadd.s32 1, %s19
      %p25 = scmp.ge.s32.totalorder %s24, 1
      %s26 = scalar_select %p25, 0, %s24
      %s27 = sadd.s32 1, %s18
      %s28 = scalar_select %p25, %s27, %s18
      %p29 = scmp.ge.s32.totalorder %s28, 2
      %s30 = scalar_select %p29, 0, %s28
      %s31 = ssub.s32 %s18, %s30
      %s32 = ssub.s32 %s19, %s26
      %s33 = sor.u32 %s31, %s32
      %p34 = scmp.eq.s32.totalorder %s33, 0
      %s36 = sadd.s32 %s35, 1
      %s37 = scalar_select %p34, %s35, %s36
      %p40 = pneg %p34
      %p41 = scmp.eq.s32.totalorder %s11, 1
      %p42 = por %p40, %p41
      %p43 = scmp.ne.s32.totalorder %s35, %s38
      %p44 = scmp.eq.s32.totalorder %s11, 0
      %p45 = por %p43, %p44
      %p46 = scmp.ne.s32.totalorder %s35, %s38
      %p47 = scmp.eq.s32.totalorder %s16, 1
      %p48 = por %p46, %p47
      %p49 = scmp.ne.s32.totalorder %s38, %s39
      %p50 = scmp.eq.s32.totalorder %s16, 0
      %p51 = por %p49, %p50
      %p52 = scmp.ne.s32.totalorder %s38, %s39
      %p53 = scmp.eq.s32.totalorder %s17, 1
      %p54 = por %p52, %p53
      %p56 = scmp.ne.s32.totalorder %s39, %s55
      %p57 = scmp.eq.s32.totalorder %s17, 0
      %p58 = por %p56, %p57
      %s59 = ssub.s32 %s18, %s30
      %p60 = scmp.eq.s32.totalorder %s59, 0
      %s62 = sadd.s32 %s61, 1
      %s63 = scalar_select %p60, %s61, %s62
      %p66 = pneg %p60
      %p67 = scmp.eq.s32.totalorder %s11, 1
      %p68 = por %p66, %p67
      %p69 = scmp.ne.s32.totalorder %s61, %s64
      %p70 = scmp.eq.s32.totalorder %s11, 0
      %p71 = por %p69, %p70
      %p72 = scmp.ne.s32.totalorder %s61, %s64
      %p73 = scmp.eq.s32.totalorder %s16, 1
      %p74 = por %p72, %p73
      %p75 = scmp.ne.s32.totalorder %s64, %s65
      %p76 = scmp.eq.s32.totalorder %s16, 0
      %p77 = por %p75, %p76
      %p78 = scmp.ne.s32.totalorder %s64, %s65
      %p79 = scmp.eq.s32.totalorder %s17, 1
      %p80 = por %p78, %p79
      %p82 = scmp.ne.s32.totalorder %s65, %s81
      %p83 = scmp.eq.s32.totalorder %s17, 0
      %p84 = por %p82, %p83
      %s85 = ssub.s32 %s18, %s30
      %s86 = ssub.s32 %s19, %s26
      %s87 = sor.u32 %s85, %s86
      %p88 = scmp.eq.s32.totalorder %s87, 0
      %s90 = sadd.s32 %s89, 1
      %s91 = scalar_select %p88, %s89, %s90
      %p94 = pneg %p88
      %p95 = scmp.eq.s32.totalorder %s11, 1
      %p96 = por %p94, %p95
      %p97 = scmp.ne.s32.totalorder %s89, %s92
      %p98 = scmp.eq.s32.totalorder %s11, 0
      %p99 = por %p97, %p98
      %p100 = scmp.ne.s32.totalorder %s89, %s92
      %p101 = scmp.eq.s32.totalorder %s16, 1
      %p102 = por %p100, %p101
      %p103 = scmp.ne.s32.totalorder %s92, %s93
      %p104 = scmp.eq.s32.totalorder %s16, 0
      %p105 = por %p103, %p104
      %p106 = scmp.ne.s32.totalorder %s92, %s93
      %p107 = scmp.eq.s32.totalorder %s17, 1
      %p108 = por %p106, %p107
      %p110 = scmp.ne.s32.totalorder %s93, %s109
      %p111 = scmp.eq.s32.totalorder %s17, 0
      %p112 = por %p110, %p111
      %p113 = scmp.le.s32.totalorder 1, %s11
      %p114 = scmp.lt.s32.totalorder %s11, 3
      %p115 = pnand %p113, %p114
      %p116 = pneg %p115
      // Predicated region
      $region9: #{tpu_custom_call.1} parent=5 // pred_check
        _
      $region10: #{tpu_custom_call.1} parent=5 // pred_check_branch
        %118 = sbr.rel (%p115) target = $region12
      $region11: #{tpu_custom_call.1} parent=5 // pred_region
        %s119 = ssub.s32 %s11, 1
      $region12: #{tpu_custom_call.1} parent=5 // pred_fallthru
        _
      %p120 = scmp.lt.s32.totalorder %s11, 2
      // Predicated region
      $region13: #{tpu_custom_call.1} parent=5 // pred_check
        %p121 = pneg %p120
      $region14: #{tpu_custom_call.1} parent=5 // pred_check_branch
        %123 = sbr.rel (%p121) target = $region16
      $region15: #{tpu_custom_call.1} parent=5 // pred_region
        // Predicated region
        $region17: #{tpu_custom_call.1} parent=15 // pred_check
          %p124 = pneg %p45
        $region18: #{tpu_custom_call.1} parent=15 // pred_check_branch
          %126 = sbr.rel (%p124) target = $region20
        $region19: #{tpu_custom_call.1} parent=15 // pred_region
          %s127 = smul.u32 2, %s19
          %p128 = scmp.lt.s32.totalorder %s18, 1
          %s129 = scalar_select %p128, %s18, 1
          %p130 = scmp.lt.s32.totalorder %s127, 1
          %s131 = scalar_select %p130, %s127, 1
          %s132 = smul.addr %s129, 2
          %s133 = sadd.s32 %s131, %s132
          %s134 = smul.addr %s133, 4
          %s135 = scalar_lea.vmem %s0, %s134
          %s136 = smul.u32 2, %s19
        $region20: #{tpu_custom_call.1} parent=15 // pred_fallthru
          _
        // Predicated region
        $region21: #{tpu_custom_call.1} parent=15 // pred_check
          %p137 = pneg %p71
        $region22: #{tpu_custom_call.1} parent=15 // pred_check_branch
          %139 = sbr.rel (%p137) target = $region24
        $region23: #{tpu_custom_call.1} parent=15 // pred_region
          %p140 = scmp.lt.s32.totalorder %s18, 1
          %s141 = scalar_select %p140, %s18, 1
          %s142 = smul.addr %s141, 8
          %s143 = scalar_lea.vmem %s1, %s142
        $region24: #{tpu_custom_call.1} parent=15 // pred_fallthru
          _
      $region16: #{tpu_custom_call.1} parent=5 // pred_fallthru
        _
      %p144 = scmp.le.s32.totalorder 1, %s11
      %p145 = scmp.lt.s32.totalorder %s11, 3
      %p146 = pnand %p144, %p145
      %p147 = pneg %p146
      // Predicated region
      $region25: #{tpu_custom_call.1} parent=5 // pred_check
        _
      $region26: #{tpu_custom_call.1} parent=5 // pred_check_branch
        %149 = sbr.rel (%p146) target = $region28
      $region27: #{tpu_custom_call.1} parent=5 // pred_region
        %s150 = ssub.s32 %s11, 1
        %s151 = smul.u32 2, %s21
        %p152 = scmp.lt.s32.totalorder %s20, 1
        %s153 = scalar_select %p152, %s20, 1
        %p154 = scmp.lt.s32.totalorder %s151, 1
        %s155 = scalar_select %p154, %s151, 1
        %s156 = smul.addr %s153, 2
        %s157 = sadd.s32 %s155, %s156
        %s158 = smul.addr %s157, 4
        %s159 = scalar_lea.vmem %s0, %s158
        %p160 = pneg %p51
        %p161 = pneg %p48
        %p162 = scmp.lt.s32.totalorder %s20, 1
        %s163 = scalar_select %p162, %s20, 1
        %s164 = smul.addr %s163, 8
        %s165 = scalar_lea.vmem %s1, %s164
        %p166 = pneg %p77
        %p167 = pneg %p74
        %p168 = pneg %p105
        %p169 = pneg %p102
        %s170 = sand.u32 %s92, 1
        %s171 = scalar_lea.sflag [#allocation3], %s170
        %s172 = sand.u32 %s92, 1
        %s173 = smul.addr %s172, 8
        %s174 = scalar_lea.vmem [#allocation2], %s173
        %s175 = smul.u32 2, %s21
        %p176 = scmp.lt.s32.totalorder %s20, 1
        %s177 = scalar_select %p176, %s20, 1
        %p178 = scmp.lt.s32.totalorder %s175, 1
        %s179 = scalar_select %p178, %s175, 1
        %s180 = smul.addr %s177, 2
        %s181 = sadd.s32 %s179, %s180
        %s182 = smul.addr %s181, 4
        %s183 = scalar_lea.vmem %s0, %s182
        %s184 = smul.u32 2, %s21
        %p185 = scmp.lt.s32.totalorder %s20, 1
        %s186 = scalar_select %p185, %s20, 1
        %s187 = smul.addr %s186, 8
        %s188 = scalar_lea.vmem %s1, %s187
        %s189 = smul.u32 2, %s21
        %v190 = vld [vmem:[%s183] sm:$0xff]
        %192 = vst [vmem:[#allocation1] ss:$2 sm:$0xff] %v190
        %v193 = vld.sshfl [vmem:[#allocation1] sm:$0xff pattern:$0x75316420]
        %v194 = vld.sshfl [vmem:[#allocation1 + $0x8] sm:$0xff pattern:$0x75316420]
        %vm197 = vcmask 1043456
        %v198 = vsel %vm197, %v193, 0.0
        %v199 = vrot.slane %v198, 4
        %v200 = vadd.f32 %v198, %v199
        %v201 = vrot.slane %v200, 2
        %v202 = vadd.f32 %v200, %v201
        %v203 = vrot.slane %v202, 1
        %v204 = vadd.f32 %v202, %v203
        %v205 = vsel %vm197, %v194, 0.0
        %v206 = vrot.slane %v205, 4
        %v207 = vadd.f32 %v205, %v206
        %v208 = vrot.slane %v207, 2
        %v209 = vadd.f32 %v207, %v208
        %v210 = vrot.slane %v209, 1
        %v211 = vadd.f32 %v209, %v210
        %v212 = vmul.f32 %v204, 0.25
        %v213 = vmul.f32 %v211, 0.25
        %v214 = vmul.f32 %v190, %v190
        %216 = vst [vmem:[#allocation1] ss:$2 sm:$0xff] %v214
        %v217 = vld.sshfl [vmem:[#allocation1] sm:$0xff pattern:$0x75316420]
        %v218 = vld.sshfl [vmem:[#allocation1 + $0x8] sm:$0xff pattern:$0x75316420]
        %v221 = vsel %vm197, %v217, 0.0
        %v222 = vrot.slane %v221, 4
        %v223 = vadd.f32 %v221, %v222
        %v224 = vrot.slane %v223, 2
        %v225 = vadd.f32 %v223, %v224
        %v226 = vrot.slane %v225, 1
        %v227 = vadd.f32 %v225, %v226
        %v228 = vsel %vm197, %v218, 0.0
        %v229 = vrot.slane %v228, 4
        %v230 = vadd.f32 %v228, %v229
        %v231 = vrot.slane %v230, 2
        %v232 = vadd.f32 %v230, %v231
        %v233 = vrot.slane %v232, 1
        %v234 = vadd.f32 %v232, %v233
        %v235 = vmul.f32 %v227, 0.25
        %v236 = vmul.f32 %v234, 0.25
        %v237 = vmul.f32 %v212, %v212
        %v238 = vmul.f32 %v213, %v213
        %v239 = vsub.f32 %v235, %v237
        %v240 = vsub.f32 %v236, %v238
        %v241 = vmax.f32 %v239, 0.0
        %v242 = vmax.f32 %v240, 0.0
        %v245 = vrot.slane %v213, 4
        %v246 = vsel %vm197, %v212, %v245
        %v248 = vsub.f32 %v190, %v246
        %v249 = vadd.f32 %v241, 1e-05
        %v250 = vadd.f32 %v242, 1e-05
        %v251 = vrsqrt.pop %v249
        %v252 = vmul.f32 %v251, %v249
        %v253 = vmul.f32 %v252, %v251
        %v254 = vmul.f32 0.5, %v253
        %v255 = vsub.f32 1.5, %v254
        %v256 = vmul.f32 %v251, %v255
        %vm257 = vweird.f32 %v249
        %vm258 = vweird.f32 %v251
        %vm259 = vmor %vm257, %vm258
        %v260 = vsel %vm259, %v251, %v256
        %v261 = vrsqrt.pop %v250
        %v262 = vmul.f32 %v261, %v250
        %v263 = vmul.f32 %v262, %v261
        %v264 = vmul.f32 0.5, %v263
        %v265 = vsub.f32 1.5, %v264
        %v266 = vmul.f32 %v261, %v265
        %vm267 = vweird.f32 %v250
        %vm268 = vweird.f32 %v261
        %vm269 = vmor %vm267, %vm268
        %v270 = vsel %vm269, %v261, %v266
        %v273 = vrot.slane %v270, 4
        %v274 = vsel %vm197, %v260, %v273
        %v276 = vmul.f32 %v248, %v274
        %v277 = vld [vmem:[%s188] sm:$0xff]
        %279 = vset.pattern.permute.xlu0 0
        %280 = vperm.xlu0 %279, %v277
        %v281 = vpop.permute.xlu0 %280
        %v283 = vunpack.c.l.s4 839922192
        %v284 = vunpack.c.0.s8 %v283
        %v285 = vperm.slane %v281, %v284
        %v287 = vmul.f32 %v276, %v285
        %v289 = vunpack.c.l.s4 1985246804
        %v290 = vunpack.c.0.s8 %v289
        %v291 = vperm.slane %v281, %v290
        %v293 = vadd.f32 %v287, %v291
        %294 = vst [vmem:[%s174] sm:$0xff] %v293
        %s295 = sand.u32 %s92, 1
        %s296 = scalar_lea.sflag [#allocation3], %s295
        %s297 = sand.u32 %s92, 1
        %s298 = smul.addr %s297, 8
        %s299 = scalar_lea.vmem [#allocation2], %s298
        // Predicated region
        $region29: #{tpu_custom_call.1} parent=27 // pred_check
          %p300 = pneg %p102
        $region30: #{tpu_custom_call.1} parent=27 // pred_check_branch
          %302 = sbr.rel (%p300) target = $region32
        $region31: #{tpu_custom_call.1} parent=27 // pred_region
          %s303 = smul.u32 2, %s21
          %305 = vsyncadd %s296, 0
          %s306 = smul.addr %s20, 2
          %s307 = sadd.s32 %s303, %s306
          %s308 = smul.addr %s307, 4
          %s309 = scalar_lea.hbm %s2, %s308
          %s311 = sshll.u32 %s299, 4
          %s312 = int_to_ptr.vmem [resolvable:$true] %s311
          %s313 = sshll.u32 %s309, 4
          %s314 = int_to_ptr.hbm [resolvable:$true] %s313
          %316 = dma.vmem_to_hbm [thread:$0]  %s312, 128, %s314, %s296
        $region32: #{tpu_custom_call.1} parent=27 // pred_fallthru
          _
      $region28: #{tpu_custom_call.1} parent=5 // pred_fallthru
        _
      %p317 = scmp.le.s32.totalorder 2, %s11
      // Predicated region
      $region33: #{tpu_custom_call.1} parent=5 // pred_check
        %p318 = pneg %p317
      $region34: #{tpu_custom_call.1} parent=5 // pred_check_branch
        %320 = sbr.rel (%p318) target = $region36
      $region35: #{tpu_custom_call.1} parent=5 // pred_region
        %s321 = ssub.s32 %s11, 2
        // Predicated region
        $region37: #{tpu_custom_call.1} parent=35 // pred_check
          %p322 = pneg %p108
        $region38: #{tpu_custom_call.1} parent=35 // pred_check_branch
          %324 = sbr.rel (%p322) target = $region40
        $region39: #{tpu_custom_call.1} parent=35 // pred_region
          %s325 = sand.u32 %s93, 1
          %s326 = scalar_lea.sflag [#allocation3], %s325
          %s327 = sand.u32 %s93, 1
          %s328 = smul.addr %s327, 8
          %s329 = scalar_lea.vmem [#allocation2], %s328
          %331 = dma.done %s326, 128
        $region40: #{tpu_custom_call.1} parent=35 // pred_fallthru
          _
      $region36: #{tpu_custom_call.1} parent=5 // pred_fallthru
        _
    $region6: #{tpu_custom_call.1} parent=1 // loop_footer
      %s15 = sadd.s32 1, %s11
    $region7: #{tpu_custom_call.1} parent=1 // loop_footer_branch
      %10 = sbr.rel target = $region3
    $region8: #{tpu_custom_call.1} parent=1 // loop_exit
      _
    %332 = vsyncpa [#allocation3], 1
    %s333 = scalar_lea.sflag [#allocation3], 1
    %334 = vsyncpa %s333, 1

</llo_original>
